<compile_context>
chip_gen: v6e
topology: v6e:2x2x1
jax: 0.10.0
libtpu: 0.0.40
codegen_flags: <defaults>
</compile_context>

<pallas_src>
import jax
import jax.numpy as jnp
from jax.experimental import pallas as pl
from jax.experimental.pallas import tpu as pltpu


def mlp_kernel(x_ref, w1_ref, b1_ref, w2_ref, b2_ref, ot_ref):
    # x_ref : (bt, num_inputs)   natural-layout batch tile (contiguous HBM read)
    # w1_ref: (H, num_inputs)    b1_ref: (H, 1)
    # w2_ref: (num_outputs, H)   b2_ref: (num_outputs, 1)
    # ot_ref: (num_outputs, bt)  lane-dense output tile (unmasked stores)
    xt = x_ref[...].T                                   # (num_inputs, bt): on-chip relayout
    h = jnp.dot(w1_ref[...], xt, preferred_element_type=jnp.float32)
    h = jnp.maximum(h + b1_ref[...], 0.0)               # (H, bt), lane-dense epilogue
    y = jnp.dot(w2_ref[...], h, preferred_element_type=jnp.float32)
    y = y + b2_ref[...]                                 # (num_outputs, bt)
    ot_ref[...] = y.astype(ot_ref.dtype)


def _pick_batch_tile(B, batch_tile):
    """Lane-axis (batch) tile: multiple of 128, capped by batch_tile, and leaving
    at least 2 grid blocks whenever the batch allows it (v7x megacore sharding
    and bounded per-core VMEM)."""
    if B <= 128:
        return B                                   # single full-array block (always legal)
    bt = min(int(batch_tile), pl.cdiv(B, 128) * 128)
    half = (B // 2) // 128 * 128                   # keep >= 2 blocks when possible
    if half >= 128:
        bt = min(bt, half)
    return max(128, (bt // 128) * 128)


def simple_estimator_forward(x, w1, b1, w2, b2, *, batch_tile=32768):
    """x: (B, num_inputs); w1: (H, num_inputs); b1: (H,);
       w2: (num_outputs, H); b2: (num_outputs,). Returns (B, num_outputs)."""
    B, num_inputs = x.shape
    H = w1.shape[0]
    num_outputs = w2.shape[0]

    bt = _pick_batch_tile(B, batch_tile)
    n_blocks = pl.cdiv(B, bt)

    b1_2d = b1.reshape(H, 1)
    b2_2d = b2.reshape(num_outputs, 1)

    itemsize = jnp.dtype(x.dtype).itemsize
    flops = 2 * B * (num_inputs * H + H * num_outputs)
    bytes_accessed = itemsize * (
        x.size + B * num_outputs + w1.size + b1.size + w2.size + b2.size
    )

    y_t = pl.pallas_call(
        mlp_kernel,
        out_shape=jax.ShapeDtypeStruct((num_outputs, B), x.dtype),
        grid_spec=pltpu.PrefetchScalarGridSpec(
            num_scalar_prefetch=0,
            grid=(n_blocks,),
            in_specs=[
                # Streamed activations in natural (batch-major) layout.
                pl.BlockSpec((bt, num_inputs), lambda i: (i, 0)),
                # Tiny weights / biases: same block every step (stay resident).
                pl.BlockSpec((H, num_inputs), lambda i: (0, 0)),
                pl.BlockSpec((H, 1), lambda i: (0, 0)),
                pl.BlockSpec((num_outputs, H), lambda i: (0, 0)),
                pl.BlockSpec((num_outputs, 1), lambda i: (0, 0)),
            ],
            # Lane-dense output tile; batch sits on the 128-lane axis.
            out_specs=pl.BlockSpec((num_outputs, bt), lambda i: (0, i)),
        ),
        compiler_params=pltpu.CompilerParams(
            dimension_semantics=("parallel",),
            vmem_limit_bytes=48 * 1024 * 1024,
        ),
        cost_estimate=pl.CostEstimate(
            flops=flops, transcendentals=0, bytes_accessed=bytes_accessed),
    )(x, w1, b1_2d, w2, b2_2d)

    # Single small (num_outputs, B) -> (B, num_outputs) transpose; the heavy
    # x-side pad/transpose passes are gone.
    return y_t.T


def init_params(key, num_inputs, num_hidden1, num_outputs, dtype=jnp.float32):
    """Deterministic init mimicking nn.Linear's U(-1/sqrt(fan_in), 1/sqrt(fan_in)).
    PyTorch layout: w1 (H, in), w2 (out, H)."""
    k1, k2, k3, k4 = jax.random.split(key, 4)
    bound1 = 1.0 / jnp.sqrt(float(num_inputs))
    bound2 = 1.0 / jnp.sqrt(float(num_hidden1))
    w1 = jax.random.uniform(k1, (num_hidden1, num_inputs), dtype,
                            minval=-bound1, maxval=bound1)
    b1 = jax.random.uniform(k2, (num_hidden1,), dtype,
                            minval=-bound1, maxval=bound1)
    w2 = jax.random.uniform(k3, (num_outputs, num_hidden1), dtype,
                            minval=-bound2, maxval=bound2)
    b2 = jax.random.uniform(k4, (num_outputs,), dtype,
                            minval=-bound2, maxval=bound2)
    return w1, b1, w2, b2


if __name__ == "__main__":
    num_inputs, num_hidden1, num_outputs = 16, 32, 4
    batch = 8

    key = jax.random.PRNGKey(0)
    kx, kp = jax.random.split(key)
    x = jax.random.normal(kx, (batch, num_inputs), jnp.float32)
    w1, b1, w2, b2 = init_params(kp, num_inputs, num_hidden1, num_outputs)

    out = jax.block_until_ready(simple_estimator_forward(x, w1, b1, w2, b2))

    # Pure-JAX reference (PyTorch nn.Linear semantics).
    ref = jnp.maximum(x @ w1.T + b1, 0.0) @ w2.T + b2
    assert out.shape == (batch, num_outputs)
    assert jnp.allclose(out, ref, atol=1e-5, rtol=1e-5)

    # Multi-block grid with a ragged final block (300 = 2*128 + 44), no padding copy.
    x_big = jax.random.normal(kx, (300, num_inputs), jnp.float32)
    out_big = jax.block_until_ready(
        simple_estimator_forward(x_big, w1, b1, w2, b2, batch_tile=128))
    ref_big = jnp.maximum(x_big @ w1.T + b1, 0.0) @ w2.T + b2
    assert out_big.shape == (300, num_outputs)
    assert jnp.allclose(out_big, ref_big, atol=1e-5, rtol=1e-5)

    print("KERNEL_OK")
</pallas_src>

<mosaic_0001>
module attributes {stable_mosaic.version = 11 : i64} {
  func.func @mlp_kernel(%arg0: i32, %arg1: memref<8x16xf32, #tpu.memory_space<vmem>>, %arg2: memref<32x16xf32, #tpu.memory_space<vmem>>, %arg3: memref<32x1xf32, #tpu.memory_space<vmem>>, %arg4: memref<4x32xf32, #tpu.memory_space<vmem>>, %arg5: memref<4x1xf32, #tpu.memory_space<vmem>>, %arg6: memref<4x8xf32, #tpu.memory_space<vmem>>) attributes {dimension_semantics = [#tpu.dimension_semantics<parallel>], iteration_bounds = array<i64: 1>, scalar_prefetch = 0 : i64, scratch_operands = 0 : i64, tpu.core_type = #tpu.core_type<tc>, window_params = [{transform_indices = @transform_0, window_bounds = array<i64: 8, 16>}, {pipeline_mode = #tpu.pipeline_mode<synchronous>, transform_indices = @transform_1, window_bounds = array<i64: 32, 16>}, {pipeline_mode = #tpu.pipeline_mode<synchronous>, transform_indices = @transform_2, window_bounds = array<i64: 32, 1>}, {pipeline_mode = #tpu.pipeline_mode<synchronous>, transform_indices = @transform_3, window_bounds = array<i64: 4, 32>}, {pipeline_mode = #tpu.pipeline_mode<synchronous>, transform_indices = @transform_4, window_bounds = array<i64: 4, 1>}, {transform_indices = @transform_5, window_bounds = array<i64: 4, 8>}]} {
    %c0 = arith.constant 0 : index
    %c0_0 = arith.constant 0 : index
    %0 = vector.load %arg1[%c0, %c0_0] : memref<8x16xf32, #tpu.memory_space<vmem>>, vector<8x16xf32>
    %1 = tpu.transpose %0, [1, 0] : vector<8x16xf32> -> vector<16x8xf32>
    %c0_1 = arith.constant 0 : index
    %c0_2 = arith.constant 0 : index
    %2 = vector.load %arg2[%c0_1, %c0_2] : memref<32x16xf32, #tpu.memory_space<vmem>>, vector<32x16xf32>
    %cst = arith.constant dense<0.000000e+00> : vector<32x8xf32>
    %3 = tpu.matmul %2, %1, %cst {dimension_numbers = #tpu.dot_dimension_numbers<[1], [0], [0], [1], [0, 0, 1, 1], [], []>} : vector<32x16xf32>, vector<16x8xf32>, vector<32x8xf32> -> vector<32x8xf32>
    %c0_3 = arith.constant 0 : index
    %c0_4 = arith.constant 0 : index
    %4 = vector.load %arg3[%c0_3, %c0_4] : memref<32x1xf32, #tpu.memory_space<vmem>>, vector<32x1xf32>
    %5 = vector.broadcast %4 : vector<32x1xf32> to vector<32x8xf32>
    %6 = arith.addf %3, %5 : vector<32x8xf32>
    %cst_5 = arith.constant 0.000000e+00 : f32
    %7 = vector.broadcast %cst_5 : f32 to vector<32x8xf32>
    %8 = arith.maximumf %6, %7 : vector<32x8xf32>
    %c0_6 = arith.constant 0 : index
    %c0_7 = arith.constant 0 : index
    %9 = vector.load %arg4[%c0_6, %c0_7] : memref<4x32xf32, #tpu.memory_space<vmem>>, vector<4x32xf32>
    %cst_8 = arith.constant dense<0.000000e+00> : vector<4x8xf32>
    %10 = tpu.matmul %9, %8, %cst_8 {dimension_numbers = #tpu.dot_dimension_numbers<[1], [0], [0], [1], [0, 0, 1, 1], [], []>} : vector<4x32xf32>, vector<32x8xf32>, vector<4x8xf32> -> vector<4x8xf32>
    %c0_9 = arith.constant 0 : index
    %c0_10 = arith.constant 0 : index
    %11 = vector.load %arg5[%c0_9, %c0_10] : memref<4x1xf32, #tpu.memory_space<vmem>>, vector<4x1xf32>
    %12 = vector.broadcast %11 : vector<4x1xf32> to vector<4x8xf32>
    %13 = arith.addf %10, %12 : vector<4x8xf32>
    %c0_11 = arith.constant 0 : index
    %c0_12 = arith.constant 0 : index
    %14 = vector.load %arg6[%c0_11, %c0_12] : memref<4x8xf32, #tpu.memory_space<vmem>>, vector<4x8xf32>
    tpu.vector_store %arg6[%c0_11, %c0_12], %13 {strides = array<i32>} : memref<4x8xf32, #tpu.memory_space<vmem>>, vector<4x8xf32>,
    return
  }
  func.func @transform_0(%arg0: i32) -> (i32, i32) {
    %c0_i32 = arith.constant 0 : i32
    %c0_i32_0 = arith.constant 0 : i32
    return %arg0, %c0_i32 : i32, i32
  }
  func.func @transform_1(%arg0: i32) -> (i32, i32) {
    %c0_i32 = arith.constant 0 : i32
    %c0_i32_0 = arith.constant 0 : i32
    %c0_i32_1 = arith.constant 0 : i32
    return %c0_i32, %c0_i32_0 : i32, i32
  }
  func.func @transform_2(%arg0: i32) -> (i32, i32) {
    %c0_i32 = arith.constant 0 : i32
    %c0_i32_0 = arith.constant 0 : i32
    %c0_i32_1 = arith.constant 0 : i32
    return %c0_i32, %c0_i32_0 : i32, i32
  }
  func.func @transform_3(%arg0: i32) -> (i32, i32) {
    %c0_i32 = arith.constant 0 : i32
    %c0_i32_0 = arith.constant 0 : i32
    %c0_i32_1 = arith.constant 0 : i32
    return %c0_i32, %c0_i32_0 : i32, i32
  }
  func.func @transform_4(%arg0: i32) -> (i32, i32) {
    %c0_i32 = arith.constant 0 : i32
    %c0_i32_0 = arith.constant 0 : i32
    %c0_i32_1 = arith.constant 0 : i32
    return %c0_i32, %c0_i32_0 : i32, i32
  }
  func.func @transform_5(%arg0: i32) -> (i32, i32) {
    %c0_i32 = arith.constant 0 : i32
    %c0_i32_0 = arith.constant 0 : i32
    return %c0_i32, %arg0 : i32, i32
  }
}

</mosaic_0001>

<llo_original>
// kernel: tpu_custom_call.1
$region0: #{tpu_custom_call.1}
  #allocation0 [shape = 'u32[]', space=smem, size = 0x4, offset = 0x4, fixed_abs, tag = 'smem constant byte address 0x4 - core index']
  #allocation1 [shape = 'u32[144,128]{1,0:T(1,128)}', space=vmem, size = 0x12000, scoped, tag = 'internal scratch']
  %s0 = inlined_call_operand.vmem [shape: f32[8,16], index: 0, kind: input, shape index: {}]
  %s1 = inlined_call_operand.vmem [shape: f32[32,16], index: 1, kind: input, shape index: {}]
  %s2 = inlined_call_operand.vmem [shape: f32[32,1], index: 2, kind: input, shape index: {}]
  %s3 = inlined_call_operand.vmem [shape: f32[4,32], index: 3, kind: input, shape index: {}]
  %s4 = inlined_call_operand.vmem [shape: f32[4,1], index: 4, kind: input, shape index: {}]
  %s5 = inlined_call_operand.hbm [shape: f32[4,8], index: 5, kind: output, shape index: {}]
  %s6 = sld [smem:[#allocation0]]
  $region30: #{tpu_custom_call.1} parent=0
    _
  %s8 = ssub.s32 1, %s6
  %s9 = scalar_select 0, %s8, %s6
  $region1: #{tpu_custom_call.1} parent=0
    #allocation2 [shape = 'u8[2048]{0}', space=vmem, size = 0x800, scoped, tag = 'output window, operand 0, single buffered']
    #allocation3 [shape = 's32[1]{0}', space=sflag, size = 0x4, scoped, tag = 'scoped memory for tpu_custom_call.1']
    %10 = vsyncpa [#allocation3], 0
    // Predicated region
    $region2: #{tpu_custom_call.1} parent=1 // pred_check
      _
    $region3: #{tpu_custom_call.1} parent=1 // pred_check_branch
      %12 = sbr.rel (0) target = $region5
    $region4: #{tpu_custom_call.1} parent=1 // pred_region
      _
    $region5: #{tpu_custom_call.1} parent=1 // pred_fallthru
      _
    // Predicated region
    $region6: #{tpu_custom_call.1} parent=1 // pred_check
      _
    $region7: #{tpu_custom_call.1} parent=1 // pred_check_branch
      %14 = sbr.rel (0) target = $region9
    $region8: #{tpu_custom_call.1} parent=1 // pred_region
      _
    $region9: #{tpu_custom_call.1} parent=1 // pred_fallthru
      _
    // Predicated region
    $region10: #{tpu_custom_call.1} parent=1 // pred_check
      _
    $region11: #{tpu_custom_call.1} parent=1 // pred_check_branch
      %16 = sbr.rel (0) target = $region13
    $region12: #{tpu_custom_call.1} parent=1 // pred_region
      _
    $region13: #{tpu_custom_call.1} parent=1 // pred_fallthru
      _
    // Predicated region
    $region14: #{tpu_custom_call.1} parent=1 // pred_check
      _
    $region15: #{tpu_custom_call.1} parent=1 // pred_check_branch
      %18 = sbr.rel (0) target = $region17
    $region16: #{tpu_custom_call.1} parent=1 // pred_region
      _
    $region17: #{tpu_custom_call.1} parent=1 // pred_fallthru
      _
    // Predicated region
    $region18: #{tpu_custom_call.1} parent=1 // pred_check
      _
    $region19: #{tpu_custom_call.1} parent=1 // pred_check_branch
      %20 = sbr.rel (0) target = $region21
    $region20: #{tpu_custom_call.1} parent=1 // pred_region
      _
    $region21: #{tpu_custom_call.1} parent=1 // pred_fallthru
      _
    %v21 = vld [vmem:[%s0] sm:$0xff]
    %v22 = vld [vmem:[%s1] sm:$0xff]
    %v23 = vld [vmem:[%s1 + $0x8] sm:$0xff]
    %v24 = vld [vmem:[%s1 + $0x10] sm:$0xff]
    %v25 = vld [vmem:[%s1 + $0x18] sm:$0xff]
    %v26 = vld [vmem:[%s2] sm:$0xff]
    %v27 = vld [vmem:[%s2 + $0x8] sm:$0xff]
    %v28 = vld [vmem:[%s2 + $0x10] sm:$0xff]
    %v29 = vld [vmem:[%s2 + $0x18] sm:$0xff]
    %31 = vset.pattern.permute.xlu0 0
    %32 = vperm.xlu0 %31, %v26
    %v33 = vpop.permute.xlu0 %32
    %36 = vset.pattern.permute.xlu0 0
    %37 = vperm.xlu0 %36, %v27
    %v38 = vpop.permute.xlu0 %37
    %41 = vset.pattern.permute.xlu0 0
    %42 = vperm.xlu0 %41, %v28
    %v43 = vpop.permute.xlu0 %42
    %46 = vset.pattern.permute.xlu0 0
    %47 = vperm.xlu0 %46, %v29
    %v48 = vpop.permute.xlu0 %47
    %vm50 = vcmask 130048
    %v52 = vsel %vm50, %v22, 0
    %v55 = vsel %vm50, %v23, 0
    %v58 = vsel %vm50, %v24, 0
    %v61 = vsel %vm50, %v25, 0
    %v64 = vsel %vm50, %v21, 0
    %66 = vmatprep.subr.mxu0 0.0
    %67 = vmatpush1.xpose.msra.mxu0 0.0
    %68 = vmatprep.subr.mxu0 0.0
    %69 = vmatpush1.xpose.msra.mxu0 0.0
    %70 = vmatprep.subr.mxu0 0.0
    %71 = vmatpush1.xpose.msra.mxu0 0.0
    %72 = vmatprep.subr.mxu0 0.0
    %73 = vmatpush1.xpose.msra.mxu0 0.0
    %74 = vmatprep.subr.mxu0 0.0
    %75 = vmatpush1.xpose.msra.mxu0 0.0
    %76 = vmatprep.subr.mxu0 0.0
    %77 = vmatpush1.xpose.msra.mxu0 0.0
    %78 = vmatprep.subr.mxu0 0.0
    %79 = vmatpush1.xpose.msra.mxu0 0.0
    %80 = vmatprep.subr.mxu0 0.0
    %81 = vmatpush1.xpose.msra.mxu0 0.0
    %82 = vmatprep.subr.mxu0 0.0
    %83 = vmatpush1.xpose.msra.mxu0 0.0
    %84 = vmatprep.subr.mxu0 0.0
    %85 = vmatpush1.xpose.msra.mxu0 0.0
    %86 = vmatprep.subr.mxu0 0.0
    %87 = vmatpush1.xpose.msra.mxu0 0.0
    %88 = vmatprep.subr.mxu0 0.0
    %89 = vmatpush1.xpose.msra.mxu0 0.0
    %90 = vmatprep.subr.mxu0 0.0
    %91 = vmatpush1.xpose.msra.mxu0 0.0
    %92 = vmatprep.subr.mxu0 0.0
    %93 = vmatpush1.xpose.msra.mxu0 0.0
    %94 = vmatprep.subr.mxu0 0.0
    %95 = vmatpush1.xpose.msra.mxu0 0.0
    %96 = vmatprep.subr.mxu0 0.0
    %97 = vmatpush1.xpose.msra.mxu0 %v64
    %98 = vmatprep.subr.mxu0 0.0
    %99 = vmatpush2.xpose.msra.mxu0 0.0
    %100 = vmatprep.subr.mxu0 0.0
    %101 = vmatpush2.xpose.msra.mxu0 0.0
    %102 = vmatprep.subr.mxu0 0.0
    %103 = vmatpush2.xpose.msra.mxu0 0.0
    %104 = vmatprep.subr.mxu0 0.0
    %105 = vmatpush2.xpose.msra.mxu0 0.0
    %106 = vmatprep.subr.mxu0 0.0
    %107 = vmatpush2.xpose.msra.mxu0 0.0
    %108 = vmatprep.subr.mxu0 0.0
    %109 = vmatpush2.xpose.msra.mxu0 0.0
    %110 = vmatprep.subr.mxu0 0.0
    %111 = vmatpush2.xpose.msra.mxu0 0.0
    %112 = vmatprep.subr.mxu0 0.0
    %113 = vmatpush2.xpose.msra.mxu0 0.0
    %114 = vmatprep.subr.mxu0 0.0
    %115 = vmatpush2.xpose.msra.mxu0 0.0
    %116 = vmatprep.subr.mxu0 0.0
    %117 = vmatpush2.xpose.msra.mxu0 0.0
    %118 = vmatprep.subr.mxu0 0.0
    %119 = vmatpush2.xpose.msra.mxu0 0.0
    %120 = vmatprep.subr.mxu0 0.0
    %121 = vmatpush2.xpose.msra.mxu0 0.0
    %122 = vmatprep.subr.mxu0 0.0
    %123 = vmatpush2.xpose.msra.mxu0 0.0
    %124 = vmatprep.subr.mxu0 0.0
    %125 = vmatpush2.xpose.msra.mxu0 0.0
    %126 = vmatprep.subr.mxu0 0.0
    %127 = vmatpush2.xpose.msra.mxu0 0.0
    %128 = vmatprep.subr.mxu0 0.0
    %129 = vmatpush2.xpose.msra.mxu0 0.0
    %130 = vmatprep.mubr.f32.mxu0 0.0
    %131 = vmatmul.mubr.f32.gmra.mxu0 %v52
    %v132 = vpop.f32.mrf.mxu0
    %v133 = vadd.f32 %v33, %v132
    %v134 = vpop.f32.mrf.mxu0
    %135 = vmatprep.mubr.f32.mxu0 0.0
    %136 = vmatmul.mubr.f32.gmra.mxu0 %v55
    %v137 = vpop.f32.mrf.mxu0
    %v138 = vadd.f32 %v38, %v137
    %v139 = vpop.f32.mrf.mxu0
    %140 = vmatprep.mubr.f32.mxu0 0.0
    %141 = vmatmul.mubr.f32.gmra.mxu0 %v58
    %v142 = vpop.f32.mrf.mxu0
    %v143 = vadd.f32 %v43, %v142
    %v144 = vpop.f32.mrf.mxu0
    %145 = vmatprep.mubr.f32.mxu0 0.0
    %146 = vmatmul.mubr.f32.gmra.mxu0 %v61
    %v147 = vpop.f32.mrf.mxu0
    %v148 = vadd.f32 %v48, %v147
    %v149 = vpop.f32.mrf.mxu0
    %150 = vdwg.mxu0
    %v151 = vmax.f32 %v133, 0.0
    %v152 = vmax.f32 %v138, 0.0
    %v153 = vmax.f32 %v143, 0.0
    %v154 = vmax.f32 %v148, 0.0
    %v155 = vld [vmem:[%s3] sm:$0xf]
    %v156 = vld [vmem:[%s4] sm:$0xf]
    %158 = vset.pattern.permute.xlu0 0
    %159 = vperm.xlu0 %158, %v156
    %v160 = vpop.permute.xlu0 %159
    %vm162 = vcmask 261120
    %v164 = vsel %vm162, %v155, 0
    %166 = vmatprep.subr.mxu0 0.0
    %167 = vmatpush1.msra.mxu0 0.0
    %168 = vmatprep.subr.mxu0 0.0
    %169 = vmatpush1.msra.mxu0 0.0
    %170 = vmatprep.subr.mxu0 0.0
    %171 = vmatpush1.msra.mxu0 0.0
    %172 = vmatprep.subr.mxu0 0.0
    %173 = vmatpush1.msra.mxu0 0.0
    %174 = vmatprep.subr.mxu0 0.0
    %175 = vmatpush1.msra.mxu0 0.0
    %176 = vmatprep.subr.mxu0 0.0
    %177 = vmatpush1.msra.mxu0 0.0
    %178 = vmatprep.subr.mxu0 0.0
    %179 = vmatpush1.msra.mxu0 0.0
    %180 = vmatprep.subr.mxu0 0.0
    %181 = vmatpush1.msra.mxu0 0.0
    %182 = vmatprep.subr.mxu0 0.0
    %183 = vmatpush1.msra.mxu0 0.0
    %184 = vmatprep.subr.mxu0 0.0
    %185 = vmatpush1.msra.mxu0 0.0
    %186 = vmatprep.subr.mxu0 0.0
    %187 = vmatpush1.msra.mxu0 0.0
    %188 = vmatprep.subr.mxu0 0.0
    %189 = vmatpush1.msra.mxu0 0.0
    %190 = vmatprep.subr.mxu0 0.0
    %191 = vmatpush1.msra.mxu0 %v154
    %192 = vmatprep.subr.mxu0 0.0
    %193 = vmatpush1.msra.mxu0 %v153
    %194 = vmatprep.subr.mxu0 0.0
    %195 = vmatpush1.msra.mxu0 %v152
    %196 = vmatprep.subr.mxu0 0.0
    %197 = vmatpush1.msra.mxu0 %v151
    %198 = vmatprep.subr.mxu0 0.0
    %199 = vmatpush2.msra.mxu0 0.0
    %200 = vmatprep.subr.mxu0 0.0
    %201 = vmatpush2.msra.mxu0 0.0
    %202 = vmatprep.subr.mxu0 0.0
    %203 = vmatpush2.msra.mxu0 0.0
    %204 = vmatprep.subr.mxu0 0.0
    %205 = vmatpush2.msra.mxu0 0.0
    %206 = vmatprep.subr.mxu0 0.0
    %207 = vmatpush2.msra.mxu0 0.0
    %208 = vmatprep.subr.mxu0 0.0
    %209 = vmatpush2.msra.mxu0 0.0
    %210 = vmatprep.subr.mxu0 0.0
    %211 = vmatpush2.msra.mxu0 0.0
    %212 = vmatprep.subr.mxu0 0.0
    %213 = vmatpush2.msra.mxu0 0.0
    %214 = vmatprep.subr.mxu0 0.0
    %215 = vmatpush2.msra.mxu0 0.0
    %216 = vmatprep.subr.mxu0 0.0
    %217 = vmatpush2.msra.mxu0 0.0
    %218 = vmatprep.subr.mxu0 0.0
    %219 = vmatpush2.msra.mxu0 0.0
    %220 = vmatprep.subr.mxu0 0.0
    %221 = vmatpush2.msra.mxu0 0.0
    %222 = vmatprep.subr.mxu0 0.0
    %223 = vmatpush2.msra.mxu0 0.0
    %224 = vmatprep.subr.mxu0 0.0
    %225 = vmatpush2.msra.mxu0 0.0
    %226 = vmatprep.subr.mxu0 0.0
    %227 = vmatpush2.msra.mxu0 0.0
    %228 = vmatprep.subr.mxu0 0.0
    %229 = vmatpush2.msra.mxu0 0.0
    %230 = vmatprep.mubr.f32.mxu0 0.0
    %231 = vmatmul.mubr.f32.gmra.mxu0 %v164
    %v232 = vpop.f32.mrf.mxu0
    %v233 = vadd.f32 %v160, %v232
    %v234 = vpop.f32.mrf.mxu0
    %235 = vdwg.mxu0
    %vm236 = vcmask 60416
    %237 = vst.msk [vmem:[#allocation2] sm:$0xf] %vm236, %v233
    // Predicated region
    $region22: #{tpu_custom_call.1} parent=1 // pred_check
      _
    $region23: #{tpu_custom_call.1} parent=1 // pred_check_branch
      %239 = sbr.rel (0) target = $region25
    $region24: #{tpu_custom_call.1} parent=1 // pred_region
      %s241 = ssub.s32 64, 64
      %242 = vsyncadd [#allocation3], %s241
      %s244 = sshll.u32 [#allocation2], 4
      %s245 = int_to_ptr.vmem [resolvable:$true] %s244
      %247 = dma.vmem_to_hbm [thread:$0]  %s245, 64, %s5, [#allocation3]
    $region25: #{tpu_custom_call.1} parent=1 // pred_fallthru
      _
    // Predicated region
    $region26: #{tpu_custom_call.1} parent=1 // pred_check
      _
    $region27: #{tpu_custom_call.1} parent=1 // pred_check_branch
      %249 = sbr.rel (0) target = $region29
    $region28: #{tpu_custom_call.1} parent=1 // pred_region
      %250 = dma.done [#allocation3], 64
    $region29: #{tpu_custom_call.1} parent=1 // pred_fallthru
      _
    %251 = vsyncpa [#allocation3], 1

</llo_original>
